<compile_context>
chip_gen: v5e
topology: v5e:2x2
jax: 0.10.0
libtpu: 0.0.40
codegen_flags: <defaults>
</compile_context>

<pallas_src>
import functools

import jax
import jax.numpy as jnp
from jax import lax
from jax.experimental import pallas as pl
from jax.experimental.pallas import tpu as pltpu

_EPS = 1e-5


def _layernorm_kernel(x_ref, o_ref, *, inv_f):
    """Normalize each row of a (TB, F) tile over the (full-extent) feature axis.

    The block's last dim equals the whole feature axis, so the Ref view holds
    exactly F valid lanes -> no lane masking. Rows are independent, so garbage
    rows in a ragged last batch tile (edge block) are harmless: their writes
    fall outside the array and are dropped by Pallas.
    """
    inv_f = jnp.float32(inv_f)
    x = x_ref[...].astype(jnp.float32)          # f32 math regardless of I/O dtype
    mean = jnp.sum(x, axis=-1, keepdims=True) * inv_f
    xc = x - mean
    var = jnp.sum(xc * xc, axis=-1, keepdims=True) * inv_f
    inv = lax.rsqrt(var + _EPS)
    # Re-derive (x - mean) from the I/O buffer for the store instead of keeping the
    # full f32 `xc` tile live across the variance reduce (VMEM/vreg relief; the
    # kernel is HBM-DMA bound and VMEM loads have spare slots).
    o_ref[...] = ((x_ref[...].astype(jnp.float32) - mean) * inv).astype(o_ref.dtype)


def _round_up(n, m):
    return ((n + m - 1) // m) * m


def layer_norm(x):
    """Equivalent of nn.functional.layer_norm(x, list(x.shape[1:])), no weight/bias."""
    orig_shape = x.shape
    b = orig_shape[0]
    f = 1
    for d in orig_shape[1:]:
        f *= d
    x2d = x.reshape(b, f)

    itemsize = jnp.dtype(x.dtype).itemsize
    # Sublane granule: 8 rows (f32), 16 (bf16), 32 (int8/fp8).
    sub = 8 * max(1, 4 // itemsize)
    # Lane padding of the VMEM tile (accounting only — nothing is padded in HBM).
    f_lanes = _round_up(f, 128)

    # Per-row VMEM bytes: double-buffered in + out I/O tiles (2*2*itemsize) plus
    # ~2 f32 working copies inside the kernel (~8 bytes). Budget stays well under
    # v7x's 64 MiB/TC physical VMEM; v5e/v6e have ample headroom.
    per_row_bytes = (4 * itemsize + 8) * f_lanes
    vmem_tile_budget = 24 * 1024 * 1024
    tb_max = max(sub, (vmem_tile_budget // per_row_bytes) // sub * sub)

    if b <= sub:
        # Tiny-batch fast path (e.g. B=2): one full-extent block, no padding, no
        # pipeline — the op is pure launch latency at this size.
        tb = b
    else:
        # ~512 rows amortizes the ~0.35 us per-grid-step overhead across
        # v5e..v7x HBM bandwidths while staying inside the VMEM budget; also cap
        # so the grid has >= 2 roughly even steps (both v7x TensorCores get work).
        tb = min(tb_max, 512, _round_up((b + 1) // 2, sub))
        tb = max(tb, sub)

    grid = (pl.cdiv(b, tb),)

    out2d = pl.pallas_call(
        functools.partial(_layernorm_kernel, inv_f=1.0 / f),
        out_shape=jax.ShapeDtypeStruct((b, f), x.dtype),
        grid=grid,
        in_specs=[pl.BlockSpec((tb, f), lambda i: (i, 0))],
        out_specs=pl.BlockSpec((tb, f), lambda i: (i, 0)),
        compiler_params=pltpu.CompilerParams(
            # Row tiles are independent -> shardable across v7x's 2 TensorCores
            # (harmless no-op on single-TC v5e/v6e).
            dimension_semantics=("parallel",),
            vmem_limit_bytes=32 * 1024 * 1024,
        ),
        cost_estimate=pl.CostEstimate(
            flops=6 * b * f,
            bytes_accessed=2 * b * f * itemsize,   # exact: no HBM padding anymore
            transcendentals=b,
        ),
    )(x2d)

    return out2d.reshape(orig_shape)


def _reference(x):
    xf = x.reshape(x.shape[0], -1).astype(jnp.float32)
    mean = jnp.mean(xf, axis=-1, keepdims=True)
    var = jnp.mean((xf - mean) ** 2, axis=-1, keepdims=True)
    return ((xf - mean) / jnp.sqrt(var + _EPS)).reshape(x.shape).astype(x.dtype)


if __name__ == "__main__":
    key = jax.random.PRNGKey(0)

    # Primary case (module's expected NCHW use): F = 4*16*16 = 1024 (lane-aligned),
    # tiny-batch fast path.
    x = jax.random.normal(key, (2, 4, 16, 16), dtype=jnp.float32)
    out = jax.block_until_ready(layer_norm(x))
    assert jnp.allclose(out, _reference(x), atol=1e-5, rtol=1e-5), "mismatch (aligned F)"

    # Ragged feature axis (F = 300, not a multiple of 128): full-extent feature block,
    # no HBM padding, exact reductions.
    x2 = jax.random.normal(jax.random.PRNGKey(1), (2, 3, 10, 10), dtype=jnp.float32)
    out2 = jax.block_until_ready(layer_norm(x2))
    assert jnp.allclose(out2, _reference(x2), atol=1e-5, rtol=1e-5), "mismatch (ragged F)"

    # Ragged batch (B = 19, not a multiple of TB): exercises the edge-block path
    # (garbage rows in the last tile are computed and dropped on writeback).
    x3 = jax.random.normal(jax.random.PRNGKey(2), (19, 4, 8, 8), dtype=jnp.float32)
    out3 = jax.block_until_ready(layer_norm(x3))
    assert jnp.allclose(out3, _reference(x3), atol=1e-5, rtol=1e-5), "mismatch (ragged B)"

    print("KERNEL_OK")
</pallas_src>

<mosaic_0001>
module attributes {stable_mosaic.version = 11 : i64} {
  func.func @_layernorm_kernel(%arg0: i32, %arg1: memref<2x1024xf32, #tpu.memory_space<vmem>>, %arg2: memref<2x1024xf32, #tpu.memory_space<vmem>>) attributes {dimension_semantics = [#tpu.dimension_semantics<parallel>], iteration_bounds = array<i64: 1>, scalar_prefetch = 0 : i64, scratch_operands = 0 : i64, tpu.core_type = #tpu.core_type<tc>, window_params = [{transform_indices = @transform_0, window_bounds = array<i64: 2, 1024>}, {transform_indices = @transform_1, window_bounds = array<i64: 2, 1024>}]} {
    %c0 = arith.constant 0 : index
    %c0_0 = arith.constant 0 : index
    %0 = vector.load %arg1[%c0, %c0_0] : memref<2x1024xf32, #tpu.memory_space<vmem>>, vector<2x1024xf32>
    %cst = arith.constant dense<0.000000e+00> : vector<2xf32>
    %1 = vector.multi_reduction <add>, %0, %cst [1] : vector<2x1024xf32> to vector<2xf32>
    %2 = vector.shape_cast %1 : vector<2xf32> to vector<2x1xf32>
    %cst_1 = arith.constant 9.765625E-4 : f32
    %3 = vector.broadcast %cst_1 : f32 to vector<2x1xf32>
    %4 = arith.mulf %2, %3 : vector<2x1xf32>
    %5 = vector.broadcast %4 : vector<2x1xf32> to vector<2x1024xf32>
    %6 = arith.subf %0, %5 : vector<2x1024xf32>
    %7 = arith.mulf %6, %6 : vector<2x1024xf32>
    %cst_2 = arith.constant dense<0.000000e+00> : vector<2xf32>
    %8 = vector.multi_reduction <add>, %7, %cst_2 [1] : vector<2x1024xf32> to vector<2xf32>
    %9 = vector.shape_cast %8 : vector<2xf32> to vector<2x1xf32>
    %cst_3 = arith.constant 9.765625E-4 : f32
    %10 = vector.broadcast %cst_3 : f32 to vector<2x1xf32>
    %11 = arith.mulf %9, %10 : vector<2x1xf32>
    %cst_4 = arith.constant 9.99999974E-6 : f32
    %12 = vector.broadcast %cst_4 : f32 to vector<2x1xf32>
    %13 = arith.addf %11, %12 : vector<2x1xf32>
    %14 = math.rsqrt %13 : vector<2x1xf32>
    %c0_5 = arith.constant 0 : index
    %c0_6 = arith.constant 0 : index
    %15 = vector.load %arg1[%c0_5, %c0_6] : memref<2x1024xf32, #tpu.memory_space<vmem>>, vector<2x1024xf32>
    %16 = vector.broadcast %4 : vector<2x1xf32> to vector<2x1024xf32>
    %17 = arith.subf %15, %16 : vector<2x1024xf32>
    %18 = vector.broadcast %14 : vector<2x1xf32> to vector<2x1024xf32>
    %19 = arith.mulf %17, %18 : vector<2x1024xf32>
    %c0_7 = arith.constant 0 : index
    %c0_8 = arith.constant 0 : index
    %20 = vector.load %arg2[%c0_7, %c0_8] : memref<2x1024xf32, #tpu.memory_space<vmem>>, vector<2x1024xf32>
    tpu.vector_store %arg2[%c0_7, %c0_8], %19 {strides = array<i32>} : memref<2x1024xf32, #tpu.memory_space<vmem>>, vector<2x1024xf32>,
    return
  }
  func.func @transform_0(%arg0: i32) -> (i32, i32) {
    %c0_i32 = arith.constant 0 : i32
    %c0_i32_0 = arith.constant 0 : i32
    return %arg0, %c0_i32 : i32, i32
  }
  func.func @transform_1(%arg0: i32) -> (i32, i32) {
    %c0_i32 = arith.constant 0 : i32
    %c0_i32_0 = arith.constant 0 : i32
    return %arg0, %c0_i32 : i32, i32
  }
}

</mosaic_0001>

<llo_original>
// kernel: tpu_custom_call.1
$region0: #{tpu_custom_call.1}
  #allocation0 [shape = 'u32[]', space=smem, size = 0x4, offset = 0x4, fixed_abs, tag = 'smem constant byte address 0x4 - core index']
  #allocation1 [shape = 'u32[72,128]{1,0:T(1,128)}', space=vmem, size = 0x9000, scoped, tag = 'internal scratch']
  %s0 = inlined_call_operand.hbm [shape: f32[2,1024], index: 0, kind: input, shape index: {}]
  %s1 = inlined_call_operand.hbm [shape: f32[2,1024], index: 1, kind: output, shape index: {}]
  %s2 = sld [smem:[#allocation0]]
  $region18: #{tpu_custom_call.1} parent=0
    _
  %s4 = ssub.s32 1, %s2
  %s5 = scalar_select 0, %s4, %s2
  $region1: #{tpu_custom_call.1} parent=0
    #allocation2 [shape = 'u8[8192]{0}', space=vmem, size = 0x2000, scoped, tag = 'input window, operand 0, single buffered']
    #allocation3 [shape = 's32[1]{0}', space=sflag, size = 0x4, scoped, tag = 'scoped memory for tpu_custom_call.1']
    #allocation4 [shape = 's32[1]{0}', space=sflag, size = 0x4, scoped, tag = 'scoped memory for tpu_custom_call.1']
    #allocation5 [shape = 'u8[8192]{0}', space=vmem, size = 0x2000, scoped, tag = 'output window, operand 0, single buffered']
    %6 = vsyncpa [#allocation3], 0
    %7 = vsyncpa [#allocation4], 0
    // Predicated region
    $region2: #{tpu_custom_call.1} parent=1 // pred_check
      _
    $region3: #{tpu_custom_call.1} parent=1 // pred_check_branch
      %9 = sbr.rel (0) target = $region5
    $region4: #{tpu_custom_call.1} parent=1 // pred_region
      %11 = vsyncadd [#allocation3], 0
      %s13 = sshll.u32 %s0, 4
      %s14 = int_to_ptr.hbm [resolvable:$true] %s13
      %s15 = sshll.u32 [#allocation2], 4
      %s16 = int_to_ptr.vmem [resolvable:$true] %s15
      %18 = dma.hbm_to_vmem [thread:$0]  %s14, 256, %s16, [#allocation3]
    $region5: #{tpu_custom_call.1} parent=1 // pred_fallthru
      _
    // Predicated region
    $region6: #{tpu_custom_call.1} parent=1 // pred_check
      _
    $region7: #{tpu_custom_call.1} parent=1 // pred_check_branch
      %20 = sbr.rel (0) target = $region9
    $region8: #{tpu_custom_call.1} parent=1 // pred_region
      %22 = dma.done [#allocation3], 256
    $region9: #{tpu_custom_call.1} parent=1 // pred_fallthru
      _
    %v23 = vld [vmem:[#allocation2] sm:$0xff]
    %v24 = vld [vmem:[#allocation2 + $0x8] sm:$0xff]
    %27 = vst [vmem:[#allocation1] ss:$4 sm:$0xff] %v23
    %s28 = scalar_lea.vmem [#allocation1], 32
    %29 = vst [vmem:[%s28] ss:$4 sm:$0xff] %v24
    %v30 = vld.sshfl [vmem:[#allocation1] sm:$0xff pattern:$0x73625140]
    %v31 = vld.sshfl [vmem:[#allocation1 + $0x8] sm:$0xff pattern:$0x73625140]
    %v32 = vld.sshfl [vmem:[#allocation1 + $0x10] sm:$0xff pattern:$0x73625140]
    %v33 = vld.sshfl [vmem:[#allocation1 + $0x18] sm:$0xff pattern:$0x73625140]
    %v34 = vld.sshfl [vmem:[#allocation1 + $0x20] sm:$0xff pattern:$0x73625140]
    %v35 = vld.sshfl [vmem:[#allocation1 + $0x28] sm:$0xff pattern:$0x73625140]
    %v36 = vld.sshfl [vmem:[#allocation1 + $0x30] sm:$0xff pattern:$0x73625140]
    %v37 = vld.sshfl [vmem:[#allocation1 + $0x38] sm:$0xff pattern:$0x73625140]
    %vm46 = vcmask 1041408
    %v47 = vsel %vm46, %v30, 0.0
    %v48 = vsel %vm46, %v31, 0.0
    %v49 = vadd.f32 %v47, %v48
    %v50 = vsel %vm46, %v32, 0.0
    %v51 = vadd.f32 %v49, %v50
    %v52 = vsel %vm46, %v33, 0.0
    %v53 = vadd.f32 %v51, %v52
    %v54 = vsel %vm46, %v34, 0.0
    %v55 = vadd.f32 %v53, %v54
    %v56 = vsel %vm46, %v35, 0.0
    %v57 = vadd.f32 %v55, %v56
    %v58 = vsel %vm46, %v36, 0.0
    %v59 = vadd.f32 %v57, %v58
    %v60 = vsel %vm46, %v37, 0.0
    %v61 = vadd.f32 %v59, %v60
    %62 = vadd.xlane.f32.xlu0 %v61
    %v63 = vpop.xlane.xlu0 %62
    %v64 = vmul.f32 %v63, 0.0009765625
    %v67 = vunpack.c.l.s4 269488144
    %v68 = vunpack.c.0.s8 %v67
    %v69 = vperm.slane %v64, %v68
    %v71 = vsub.f32 %v23, %v69
    %v72 = vsub.f32 %v24, %v69
    %v73 = vmul.f32 %v71, %v71
    %v74 = vmul.f32 %v72, %v72
    %77 = vst [vmem:[#allocation1] ss:$4 sm:$0xff] %v73
    %s78 = scalar_lea.vmem [#allocation1], 32
    %79 = vst [vmem:[%s78] ss:$4 sm:$0xff] %v74
    %v80 = vld.sshfl [vmem:[#allocation1] sm:$0xff pattern:$0x73625140]
    %v81 = vld.sshfl [vmem:[#allocation1 + $0x8] sm:$0xff pattern:$0x73625140]
    %v82 = vld.sshfl [vmem:[#allocation1 + $0x10] sm:$0xff pattern:$0x73625140]
    %v83 = vld.sshfl [vmem:[#allocation1 + $0x18] sm:$0xff pattern:$0x73625140]
    %v84 = vld.sshfl [vmem:[#allocation1 + $0x20] sm:$0xff pattern:$0x73625140]
    %v85 = vld.sshfl [vmem:[#allocation1 + $0x28] sm:$0xff pattern:$0x73625140]
    %v86 = vld.sshfl [vmem:[#allocation1 + $0x30] sm:$0xff pattern:$0x73625140]
    %v87 = vld.sshfl [vmem:[#allocation1 + $0x38] sm:$0xff pattern:$0x73625140]
    %v96 = vsel %vm46, %v80, 0.0
    %v97 = vsel %vm46, %v81, 0.0
    %v98 = vadd.f32 %v96, %v97
    %v99 = vsel %vm46, %v82, 0.0
    %v100 = vadd.f32 %v98, %v99
    %v101 = vsel %vm46, %v83, 0.0
    %v102 = vadd.f32 %v100, %v101
    %v103 = vsel %vm46, %v84, 0.0
    %v104 = vadd.f32 %v102, %v103
    %v105 = vsel %vm46, %v85, 0.0
    %v106 = vadd.f32 %v104, %v105
    %v107 = vsel %vm46, %v86, 0.0
    %v108 = vadd.f32 %v106, %v107
    %v109 = vsel %vm46, %v87, 0.0
    %v110 = vadd.f32 %v108, %v109
    %111 = vadd.xlane.f32.xlu0 %v110
    %v112 = vpop.xlane.xlu0 %111
    %v113 = vmul.f32 %v112, 0.0009765625
    %v114 = vadd.f32 %v113, 1e-05
    %v115 = vrsqrt.pop %v114
    %v116 = vmul.f32 %v115, %v114
    %v117 = vmul.f32 %v116, %v115
    %v118 = vmul.f32 0.5, %v117
    %v119 = vsub.f32 1.5, %v118
    %v120 = vmul.f32 %v115, %v119
    %vm121 = vweird.f32 %v114
    %vm122 = vweird.f32 %v115
    %vm123 = vmor %vm121, %vm122
    %v124 = vsel %vm123, %v115, %v120
    %v127 = vunpack.c.l.s4 269488144
    %v128 = vunpack.c.0.s8 %v127
    %v129 = vperm.slane %v124, %v128
    %v131 = vmul.f32 %v71, %v129
    %v132 = vmul.f32 %v72, %v129
    %133 = vst [vmem:[#allocation5] sm:$0xff] %v131
    %134 = vst [vmem:[#allocation5 + $0x8] sm:$0xff] %v132
    // Predicated region
    $region10: #{tpu_custom_call.1} parent=1 // pred_check
      _
    $region11: #{tpu_custom_call.1} parent=1 // pred_check_branch
      %136 = sbr.rel (0) target = $region13
    $region12: #{tpu_custom_call.1} parent=1 // pred_region
      %138 = vsyncadd [#allocation4], 0
      %s140 = sshll.u32 [#allocation5], 4
      %s141 = int_to_ptr.vmem [resolvable:$true] %s140
      %s142 = sshll.u32 %s1, 4
      %s143 = int_to_ptr.hbm [resolvable:$true] %s142
      %145 = dma.vmem_to_hbm [thread:$0]  %s141, 256, %s143, [#allocation4]
    $region13: #{tpu_custom_call.1} parent=1 // pred_fallthru
      _
    // Predicated region
    $region14: #{tpu_custom_call.1} parent=1 // pred_check
      _
    $region15: #{tpu_custom_call.1} parent=1 // pred_check_branch
      %147 = sbr.rel (0) target = $region17
    $region16: #{tpu_custom_call.1} parent=1 // pred_region
      %149 = dma.done [#allocation4], 256
    $region17: #{tpu_custom_call.1} parent=1 // pred_fallthru
      _
    %150 = vsyncpa [#allocation3], 1
    %151 = vsyncpa [#allocation4], 1

</llo_original>
